<compile_context>
chip_gen: v6e
topology: v6e:2x2x1
jax: 0.10.0
libtpu: 0.0.40
codegen_flags: <defaults>
</compile_context>

<pallas_src>
import functools

import jax
import jax.numpy as jnp
from jax.experimental import pallas as pl
from jax.experimental.pallas import tpu as pltpu


_LANE = 128


def _cond_entropy_partial_kernel(x_ref, out_ref, *, tb, true_b, need_mask):
    """One (tb, C) batch tile -> scalar partial sum of per-row sum_c p*logp."""
    x = x_ref[...].astype(jnp.float32)               # (tb, C) f32 in vregs
    m = jnp.max(x, axis=1, keepdims=True)            # (tb, 1)
    s = x - m                                        # shifted logits
    e = jnp.exp(s)                                   # (tb, C)  (EUP)
    denom = jnp.sum(e, axis=1, keepdims=True)        # (tb, 1), >= 1
    es = jnp.sum(e * s, axis=1, keepdims=True)       # (tb, 1)
    # sum_c p*logp == sum_c(e*s)/denom - log(denom); exact divide on tb values.
    h = es / denom - jnp.log(denom)                  # (tb, 1)
    if need_mask:
        row = (jax.lax.broadcasted_iota(jnp.int32, (tb, 1), 0)
               + pl.program_id(0) * tb)
        h = jnp.where(row < true_b, h, 0.0)          # zero out padded rows
    out_ref[...] = jnp.sum(h, axis=0, keepdims=True)  # (1, 1) partial sum


def _chip_vmem():
    """Physical VMEM bytes per core (conservative 64 MiB if undetectable)."""
    try:
        info = pltpu.get_tpu_info()
        return int(getattr(info, "vmem_capacity_bytes", 64 << 20))
    except Exception:
        return 64 << 20


def _pick_tb(B, C, dtype, phys_vmem):
    """Pick the batch-tile height from a chip-gated, intermediate-aware budget."""
    itemsize = jnp.dtype(dtype).itemsize
    sub = max(8, 32 // itemsize)                 # sublane quantum: 8 f32 / 16 bf16
    c_padded = -(-C // _LANE) * _LANE            # lane-padded width in VMEM
    # Per-row footprint: double-buffered input rows + ~3 f32-wide intermediates
    # (the upcast of x, exp(s), and e*s) once the tile exceeds the vreg file.
    per_row = c_padded * (2 * itemsize + 3 * 4)
    small_vmem = phys_vmem <= (64 << 20)         # v7x-class (2 TCs, 64 MiB VMEM)
    budget = (40 << 20) if small_vmem else (80 << 20)
    max_rows = max(sub, (budget // per_row) // sub * sub)

    if B <= max_rows:
        tb = -(-B // sub) * sub                  # whole (padded) batch, one tile
        if small_vmem and B > sub:
            # Two TensorCores share the chip: guarantee >= 2 "parallel" steps.
            half = -(-B // 2)
            tb = max(sub, -(-half // sub) * sub)
        return tb

    # Prefer a tile that divides B (no padding pass) as long as it stays big.
    t = max_rows
    floor_t = max(sub, (max_rows // 2 // sub) * sub)
    while t >= floor_t:
        if B % t == 0:
            return t
        t -= sub
    return max_rows                              # ragged tail handled by pad+mask


def _vmem_limit_bytes(tb, C, dtype, phys_vmem):
    itemsize = jnp.dtype(dtype).itemsize
    c_padded = -(-C // _LANE) * _LANE
    need = 2 * tb * c_padded * itemsize          # double-buffered input blocks
    need += 3 * tb * c_padded * 4                # f32 upcast + exp + product temps
    need += 2 * 8 * _LANE * 4                    # (1,1) output blocks (tile-padded)
    need += 4 << 20                              # headroom
    need = max(need, 32 << 20)
    return int(min(need, (phys_vmem * 9) // 10))


def conditional_entropy_loss(x, *, tb=None):
    """Pallas implementation of ConditionalEntropyLoss.forward for 2-D logits."""
    B, C = x.shape
    phys_vmem = _chip_vmem()
    if tb is None:
        tb = _pick_tb(B, C, x.dtype, phys_vmem)
    num_tiles = -(-B // tb)
    B_pad = num_tiles * tb
    xp = x if B_pad == B else jnp.pad(x, ((0, B_pad - B), (0, 0)))

    itemsize = jnp.dtype(x.dtype).itemsize
    kernel = functools.partial(
        _cond_entropy_partial_kernel, tb=tb, true_b=B, need_mask=(B_pad != B))

    partials = pl.pallas_call(
        kernel,
        out_shape=jax.ShapeDtypeStruct((num_tiles, 1), jnp.float32),
        grid=(num_tiles,),
        in_specs=[pl.BlockSpec((tb, C), lambda i: (i, 0))],
        out_specs=pl.BlockSpec((1, 1), lambda i: (i, 0)),
        compiler_params=pltpu.CompilerParams(
            dimension_semantics=("parallel",),       # independent batch tiles
            vmem_limit_bytes=_vmem_limit_bytes(tb, C, x.dtype, phys_vmem),
        ),
        cost_estimate=pl.CostEstimate(
            flops=6 * B_pad * C,
            transcendentals=B_pad * C + B_pad,
            bytes_accessed=B_pad * C * itemsize + num_tiles * 4,
        ),
    )(xp)

    # -1.0 * mean over the true batch rows (padded rows were masked to 0).
    return -(jnp.sum(partials) / B)


def _reference(x):
    x = x.astype(jnp.float32)
    logp = jax.nn.log_softmax(x, axis=1)
    p = jax.nn.softmax(x, axis=1)
    b = jnp.sum(p * logp, axis=1)
    return -1.0 * jnp.mean(b, axis=0)


if __name__ == "__main__":
    key = jax.random.PRNGKey(0)
    k1, k2, k3 = jax.random.split(key, 3)

    # Case 1: single tile, (N, C) logits like the PyTorch module.
    B, C = 8, 32
    x = jax.random.normal(k1, (B, C), dtype=jnp.float32)
    out = jax.block_until_ready(conditional_entropy_loss(x))
    ref = _reference(x)
    assert jnp.allclose(out, ref, atol=1e-5, rtol=1e-5), (out, ref)

    # Case 2: multi-tile grid with a forced small tile (grid > 1, no padding).
    B2, C2 = 32, 128
    x2 = jax.random.normal(k2, (B2, C2), dtype=jnp.float32)
    out2 = jax.block_until_ready(conditional_entropy_loss(x2, tb=8))
    ref2 = _reference(x2)
    assert jnp.allclose(out2, ref2, atol=1e-5, rtol=1e-5), (out2, ref2)

    # Case 3: awkward batch (B % tb != 0) -> pad + in-kernel mask path.
    B3, C3 = 30, 96
    x3 = jax.random.normal(k3, (B3, C3), dtype=jnp.float32)
    out3 = jax.block_until_ready(conditional_entropy_loss(x3, tb=8))
    ref3 = _reference(x3)
    assert jnp.allclose(out3, ref3, atol=1e-5, rtol=1e-5), (out3, ref3)

    print("KERNEL_OK")
</pallas_src>

<mosaic_0001>
module attributes {stable_mosaic.version = 11 : i64} {
  func.func @_cond_entropy_partial_kernel(%arg0: i32, %arg1: memref<8x32xf32, #tpu.memory_space<vmem>>, %arg2: memref<1x1xf32, #tpu.memory_space<vmem>>) attributes {dimension_semantics = [#tpu.dimension_semantics<parallel>], iteration_bounds = array<i64: 1>, scalar_prefetch = 0 : i64, scratch_operands = 0 : i64, tpu.core_type = #tpu.core_type<tc>, window_params = [{transform_indices = @transform_0, window_bounds = array<i64: 8, 32>}, {transform_indices = @transform_1, window_bounds = array<i64: 1, 1>}]} {
    %c0 = arith.constant 0 : index
    %c0_0 = arith.constant 0 : index
    %0 = vector.load %arg1[%c0, %c0_0] : memref<8x32xf32, #tpu.memory_space<vmem>>, vector<8x32xf32>
    %cst = arith.constant dense<0xFF800000> : vector<8xf32>
    %1 = vector.multi_reduction <maximumf>, %0, %cst [1] : vector<8x32xf32> to vector<8xf32>
    %2 = vector.shape_cast %1 : vector<8xf32> to vector<8x1xf32>
    %3 = vector.broadcast %2 : vector<8x1xf32> to vector<8x32xf32>
    %4 = arith.subf %0, %3 : vector<8x32xf32>
    %5 = math.exp %4 : vector<8x32xf32>
    %cst_1 = arith.constant dense<0.000000e+00> : vector<8xf32>
    %6 = vector.multi_reduction <add>, %5, %cst_1 [1] : vector<8x32xf32> to vector<8xf32>
    %7 = vector.shape_cast %6 : vector<8xf32> to vector<8x1xf32>
    %8 = arith.mulf %5, %4 : vector<8x32xf32>
    %cst_2 = arith.constant dense<0.000000e+00> : vector<8xf32>
    %9 = vector.multi_reduction <add>, %8, %cst_2 [1] : vector<8x32xf32> to vector<8xf32>
    %10 = vector.shape_cast %9 : vector<8xf32> to vector<8x1xf32>
    %11 = arith.divf %10, %7 : vector<8x1xf32>
    %12 = math.log %7 : vector<8x1xf32>
    %13 = arith.subf %11, %12 : vector<8x1xf32>
    %cst_3 = arith.constant dense<0.000000e+00> : vector<1xf32>
    %14 = vector.multi_reduction <add>, %13, %cst_3 [0] : vector<8x1xf32> to vector<1xf32>
    %15 = vector.shape_cast %14 : vector<1xf32> to vector<1x1xf32>
    %c0_4 = arith.constant 0 : index
    %c0_5 = arith.constant 0 : index
    %16 = vector.load %arg2[%c0_4, %c0_5] : memref<1x1xf32, #tpu.memory_space<vmem>>, vector<1x1xf32>
    tpu.vector_store %arg2[%c0_4, %c0_5], %15 {strides = array<i32>} : memref<1x1xf32, #tpu.memory_space<vmem>>, vector<1x1xf32>,
    return
  }
  func.func @transform_0(%arg0: i32) -> (i32, i32) {
    %c0_i32 = arith.constant 0 : i32
    %c0_i32_0 = arith.constant 0 : i32
    return %arg0, %c0_i32 : i32, i32
  }
  func.func @transform_1(%arg0: i32) -> (i32, i32) {
    %c0_i32 = arith.constant 0 : i32
    %c0_i32_0 = arith.constant 0 : i32
    return %arg0, %c0_i32 : i32, i32
  }
}

</mosaic_0001>

<llo_original>
// kernel: tpu_custom_call.1
$region0: #{tpu_custom_call.1}
  #allocation0 [shape = 'u32[]', space=smem, size = 0x4, offset = 0x4, fixed_abs, tag = 'smem constant byte address 0x4 - core index']
  #allocation1 [shape = 'u32[144,128]{1,0:T(1,128)}', space=vmem, size = 0x12000, scoped, tag = 'internal scratch']
  %s0 = inlined_call_operand.hbm [shape: f32[8,32], index: 0, kind: input, shape index: {}]
  %s1 = inlined_call_operand.hbm [shape: f32[1,1], index: 1, kind: output, shape index: {}]
  %s2 = sld [smem:[#allocation0]]
  $region18: #{tpu_custom_call.1} parent=0
    _
  %s4 = ssub.s32 1, %s2
  %s5 = scalar_select 0, %s4, %s2
  $region1: #{tpu_custom_call.1} parent=0
    #allocation2 [shape = 'u8[4096]{0}', space=vmem, size = 0x1000, scoped, tag = 'input window, operand 0, single buffered']
    #allocation3 [shape = 's32[1]{0}', space=sflag, size = 0x4, scoped, tag = 'scoped memory for tpu_custom_call.1']
    #allocation4 [shape = 's32[1]{0}', space=sflag, size = 0x4, scoped, tag = 'scoped memory for tpu_custom_call.1']
    #allocation5 [shape = 'u8[512]{0}', space=vmem, size = 0x400, scoped, tag = 'output window, operand 0, single buffered']
    %6 = vsyncpa [#allocation3], 0
    %7 = vsyncpa [#allocation4], 0
    // Predicated region
    $region2: #{tpu_custom_call.1} parent=1 // pred_check
      _
    $region3: #{tpu_custom_call.1} parent=1 // pred_check_branch
      %9 = sbr.rel (0) target = $region5
    $region4: #{tpu_custom_call.1} parent=1 // pred_region
      %s11 = ssub.s32 128, 128
      %12 = vsyncadd [#allocation3], %s11
      %s14 = sshll.u32 [#allocation2], 4
      %s15 = int_to_ptr.vmem [resolvable:$true] %s14
      %17 = dma.hbm_to_vmem [thread:$0]  %s0, 128, %s15, [#allocation3]
    $region5: #{tpu_custom_call.1} parent=1 // pred_fallthru
      _
    // Predicated region
    $region6: #{tpu_custom_call.1} parent=1 // pred_check
      _
    $region7: #{tpu_custom_call.1} parent=1 // pred_check_branch
      %19 = sbr.rel (0) target = $region9
    $region8: #{tpu_custom_call.1} parent=1 // pred_region
      %20 = dma.done [#allocation3], 128
    $region9: #{tpu_custom_call.1} parent=1 // pred_fallthru
      _
    %v21 = vld [vmem:[#allocation2] sm:$0xff]
    %vm22 = vcmask 261120
    %v23 = vsel %vm22, %v21, -inf
    %24 = vmax.xlane.f32.xlu0 %v23
    %v25 = vpop.xlane.xlu0 %24
    %v26 = vsub.f32 %v21, %v25
    %v27 = vmul.f32 %v26, 1.442695
    %v28 = vpow.pop %v27
    %v29 = vsel %vm22, %v28, 0.0
    %30 = vadd.xlane.f32.xlu0 %v29
    %v31 = vpop.xlane.xlu0 %30
    %v32 = vmul.f32 %v28, %v26
    %v33 = vsel %vm22, %v32, 0.0
    %34 = vadd.xlane.f32.xlu0 %v33
    %v35 = vpop.xlane.xlu0 %34
    %v36 = vrcp.pop %v31
    %v37 = vmul.f32 %v35, %v36
    %v38 = vlog2.pop %v31
    %v39 = vmul.f32 %v38, 0.6931472
    %v40 = vsub.f32 %v37, %v39
    %v41 = vrot.slane %v40, 4
    %v42 = vadd.f32 %v40, %v41
    %v43 = vrot.slane %v42, 2
    %v44 = vadd.f32 %v42, %v43
    %v45 = vrot.slane %v44, 1
    %v46 = vadd.f32 %v44, %v45
    %vm47 = vcmask 0
    %48 = vst.msk [vmem:[#allocation5] sm:$0x1] %vm47, %v46
    // Predicated region
    $region10: #{tpu_custom_call.1} parent=1 // pred_check
      _
    $region11: #{tpu_custom_call.1} parent=1 // pred_check_branch
      %50 = sbr.rel (0) target = $region13
    $region12: #{tpu_custom_call.1} parent=1 // pred_region
      %s52 = ssub.s32 16, 16
      %53 = vsyncadd [#allocation4], %s52
      %s55 = sshll.u32 [#allocation5], 4
      %s56 = int_to_ptr.vmem [resolvable:$true] %s55
      %58 = dma.vmem_to_hbm [thread:$0]  %s56, 16, %s1, [#allocation4]
    $region13: #{tpu_custom_call.1} parent=1 // pred_fallthru
      _
    // Predicated region
    $region14: #{tpu_custom_call.1} parent=1 // pred_check
      _
    $region15: #{tpu_custom_call.1} parent=1 // pred_check_branch
      %60 = sbr.rel (0) target = $region17
    $region16: #{tpu_custom_call.1} parent=1 // pred_region
      %61 = dma.done [#allocation4], 16
    $region17: #{tpu_custom_call.1} parent=1 // pred_fallthru
      _
    %62 = vsyncpa [#allocation3], 1
    %63 = vsyncpa [#allocation4], 1

</llo_original>
